<compile_context>
chip_gen: v5e
topology: v5e:2x2
jax: 0.10.0
libtpu: 0.0.40
codegen_flags: <defaults>
</compile_context>

<pallas_src>
import jax
import jax.numpy as jnp
from jax.experimental import pallas as pl
from jax.experimental.pallas import tpu as pltpu


def _h_swish_kernel(x_ref, o_ref):
    x = x_ref[...].astype(jnp.float32)
    # h_sigmoid(x) = relu6(x + 3) / 6 ;  h_swish(x) = x * h_sigmoid(x)
    hs = jnp.clip(x + 3.0, 0.0, 6.0) * (1.0 / 6.0)
    o_ref[...] = (x * hs).astype(o_ref.dtype)


_LANE_CHOICES = (4096, 2048, 1024, 512, 256, 128)


def _sublane_for(itemsize):
    # packed sublane multiple per dtype width: f32 -> 8, bf16 -> 16, int8/fp8 -> 32
    return {4: 8, 2: 16, 1: 32}.get(int(itemsize), 8)


def _budgets():
    """(block_bytes, vmem_limit_bytes) tuned per TPU generation."""
    try:
        vmem_cap = int(pltpu.get_tpu_info().vmem_capacity_bytes)
    except Exception:
        vmem_cap = 64 * 1024 * 1024  # conservative default
    if vmem_cap <= 64 * 1024 * 1024:
        # v7x-class: 64 MiB per TC -> ~6 MiB block (live = 2 arrays x 2 bufs ~ 24 MiB)
        return 6 * 1024 * 1024, 48 * 1024 * 1024
    # v5e/v6e: 128 MiB physical VMEM -> bigger blocks, fewer grid steps
    return 12 * 1024 * 1024, 96 * 1024 * 1024


def h_swish(x):
    """h_swish on an arbitrary-shape (e.g. NCHW) tensor via a Pallas TPU kernel."""
    orig_shape = x.shape
    dtype = x.dtype
    total = int(x.size)
    itemsize = jnp.dtype(dtype).itemsize
    sublane = _sublane_for(itemsize)
    block_bytes, vmem_limit = _budgets()

    # ---- choose a lane-dense 2-D view, avoiding pad/slice whenever possible ----
    lanes = None
    for cand in _LANE_CHOICES:
        if total % cand == 0:
            lanes = cand
            break

    pad = 0
    if lanes is not None:
        n_rows = total // lanes                      # fast path: pure reshape, no pad
    elif total * itemsize <= block_bytes:
        lanes = total                                # ragged but small: one full-extent block
        n_rows = 1
    else:
        lanes = 1024                                 # rare fallback: minimal tail pad
        n_rows = pl.cdiv(total, lanes)
        pad = n_rows * lanes - total

    x_flat = x.reshape(-1)
    if pad:
        x_flat = jnp.pad(x_flat, (0, pad))
    x2 = x_flat.reshape(n_rows, lanes)

    # ---- byte-budgeted block rows (sublane-aligned), with >=2 grid steps when possible ----
    if n_rows <= 2 * sublane:
        block_rows = n_rows                          # full-extent rows: always legal
    else:
        target_rows = max(sublane, (block_bytes // (lanes * itemsize)) // sublane * sublane)
        half_rows = max(sublane, (pl.cdiv(n_rows, 2) // sublane) * sublane)
        block_rows = min(target_rows, half_rows)     # cap so the grid keeps >=2 steps (v7x)

    grid = (pl.cdiv(n_rows, block_rows),)
    padded_total = n_rows * lanes

    out2 = pl.pallas_call(
        _h_swish_kernel,
        out_shape=jax.ShapeDtypeStruct((n_rows, lanes), dtype),
        grid_spec=pltpu.PrefetchScalarGridSpec(
            num_scalar_prefetch=0,
            grid=grid,
            in_specs=[pl.BlockSpec((block_rows, lanes), lambda i: (i, 0))],
            out_specs=pl.BlockSpec((block_rows, lanes), lambda i: (i, 0)),
        ),
        input_output_aliases={0: 0},                 # elementwise, same shape/dtype
        compiler_params=pltpu.CompilerParams(
            dimension_semantics=("parallel",),       # lets v7x shard steps over both TCs
            vmem_limit_bytes=vmem_limit,
        ),
        cost_estimate=pl.CostEstimate(
            flops=5 * padded_total,
            transcendentals=0,
            bytes_accessed=2 * padded_total * itemsize,
        ),
    )(x2)

    if pad:
        return out2.reshape(-1)[:total].reshape(orig_shape)
    return out2.reshape(orig_shape)


if __name__ == "__main__":
    key = jax.random.PRNGKey(0)
    x = jax.random.normal(key, (2, 4, 16, 16), dtype=jnp.float32) * 4.0

    out = h_swish(x)
    out = jax.block_until_ready(out)

    # Reference check against plain JAX implementation of the same math.
    ref = x * (jnp.clip(x + 3.0, 0.0, 6.0) / 6.0)
    assert out.shape == x.shape
    assert out.dtype == x.dtype
    assert jnp.allclose(out, ref, atol=1e-6, rtol=1e-6)

    print("KERNEL_OK")
</pallas_src>

<mosaic_0001>
module attributes {stable_mosaic.version = 11 : i64} {
  func.func @_h_swish_kernel(%arg0: i32, %arg1: memref<1x2048xf32, #tpu.memory_space<vmem>>, %arg2: memref<1x2048xf32, #tpu.memory_space<vmem>>) attributes {dimension_semantics = [#tpu.dimension_semantics<parallel>], iteration_bounds = array<i64: 1>, scalar_prefetch = 0 : i64, scratch_operands = 0 : i64, tpu.core_type = #tpu.core_type<tc>, window_params = [{transform_indices = @transform_0, window_bounds = array<i64: 1, 2048>}, {transform_indices = @transform_1, window_bounds = array<i64: 1, 2048>}]} {
    %c0 = arith.constant 0 : index
    %c0_0 = arith.constant 0 : index
    %0 = vector.load %arg1[%c0, %c0_0] : memref<1x2048xf32, #tpu.memory_space<vmem>>, vector<1x2048xf32>
    %cst = arith.constant 3.000000e+00 : f32
    %1 = vector.broadcast %cst : f32 to vector<1x2048xf32>
    %2 = arith.addf %0, %1 : vector<1x2048xf32>
    %cst_1 = arith.constant 0.000000e+00 : f32
    %cst_2 = arith.constant 6.000000e+00 : f32
    %3 = vector.broadcast %cst_1 : f32 to vector<1x2048xf32>
    %4 = arith.maximumf %3, %2 : vector<1x2048xf32>
    %5 = vector.broadcast %cst_2 : f32 to vector<1x2048xf32>
    %6 = arith.minimumf %5, %4 : vector<1x2048xf32>
    %cst_3 = arith.constant 0.166666672 : f32
    %7 = vector.broadcast %cst_3 : f32 to vector<1x2048xf32>
    %8 = arith.mulf %6, %7 : vector<1x2048xf32>
    %9 = arith.mulf %0, %8 : vector<1x2048xf32>
    %c0_4 = arith.constant 0 : index
    %c0_5 = arith.constant 0 : index
    %10 = vector.load %arg2[%c0_4, %c0_5] : memref<1x2048xf32, #tpu.memory_space<vmem>>, vector<1x2048xf32>
    tpu.vector_store %arg2[%c0_4, %c0_5], %9 {strides = array<i32>} : memref<1x2048xf32, #tpu.memory_space<vmem>>, vector<1x2048xf32>,
    return
  }
  func.func @transform_0(%arg0: i32) -> (i32, i32) {
    %c0_i32 = arith.constant 0 : i32
    %c0_i32_0 = arith.constant 0 : i32
    return %arg0, %c0_i32 : i32, i32
  }
  func.func @transform_1(%arg0: i32) -> (i32, i32) {
    %c0_i32 = arith.constant 0 : i32
    %c0_i32_0 = arith.constant 0 : i32
    return %arg0, %c0_i32 : i32, i32
  }
}

</mosaic_0001>

<llo_original>
// kernel: tpu_custom_call.1
$region0: #{tpu_custom_call.1}
  #allocation0 [shape = 'u32[]', space=smem, size = 0x4, offset = 0x4, fixed_abs, tag = 'smem constant byte address 0x4 - core index']
  #allocation1 [shape = 'u32[72,128]{1,0:T(1,128)}', space=vmem, size = 0x9000, scoped, tag = 'internal scratch']
  %s0 = inlined_call_operand.hbm [shape: f32[1,2048], index: 0, kind: input, shape index: {}, may-alias: {0,1}]
  %s1 = inlined_call_operand.hbm [shape: f32[1,2048], index: 1, kind: output, shape index: {}, may-alias: {0,1}]
  %s2 = sld [smem:[#allocation0]]
  $region18: #{tpu_custom_call.1} parent=0
    _
  %s4 = ssub.s32 1, %s2
  %s5 = scalar_select 0, %s4, %s2
  $region1: #{tpu_custom_call.1} parent=0
    #allocation2 [shape = 'u8[8192]{0}', space=vmem, size = 0x2000, scoped, tag = 'input window, operand 0, single buffered']
    #allocation3 [shape = 's32[1]{0}', space=sflag, size = 0x4, scoped, tag = 'scoped memory for tpu_custom_call.1']
    #allocation4 [shape = 's32[1]{0}', space=sflag, size = 0x4, scoped, tag = 'scoped memory for tpu_custom_call.1']
    #allocation5 [shape = 'u8[8192]{0}', space=vmem, size = 0x2000, scoped, tag = 'output window, operand 0, single buffered']
    %6 = vsyncpa [#allocation3], 0
    %7 = vsyncpa [#allocation4], 0
    // Predicated region
    $region2: #{tpu_custom_call.1} parent=1 // pred_check
      _
    $region3: #{tpu_custom_call.1} parent=1 // pred_check_branch
      %9 = sbr.rel (0) target = $region5
    $region4: #{tpu_custom_call.1} parent=1 // pred_region
      %11 = vsyncadd [#allocation3], 0
      %s13 = sshll.u32 %s0, 4
      %s14 = int_to_ptr.hbm [resolvable:$true] %s13
      %s15 = sshll.u32 [#allocation2], 4
      %s16 = int_to_ptr.vmem [resolvable:$true] %s15
      %18 = dma.hbm_to_vmem [thread:$0]  %s14, 256, %s16, [#allocation3]
    $region5: #{tpu_custom_call.1} parent=1 // pred_fallthru
      _
    // Predicated region
    $region6: #{tpu_custom_call.1} parent=1 // pred_check
      _
    $region7: #{tpu_custom_call.1} parent=1 // pred_check_branch
      %20 = sbr.rel (0) target = $region9
    $region8: #{tpu_custom_call.1} parent=1 // pred_region
      %22 = dma.done [#allocation3], 256
    $region9: #{tpu_custom_call.1} parent=1 // pred_fallthru
      _
    %v23 = vld [vmem:[#allocation2] sm:$0xff]
    %v24 = vld [vmem:[#allocation2 + $0x8] sm:$0xff]
    %v25 = vadd.f32 %v23, 3.0
    %v26 = vadd.f32 %v24, 3.0
    %v27 = vmax.f32 %v25, 0.0
    %v28 = vmax.f32 %v26, 0.0
    %v29 = vmin.f32 %v27, 6.0
    %v30 = vmin.f32 %v28, 6.0
    %v31 = vmul.f32 %v29, 0.16666667
    %v32 = vmul.f32 %v30, 0.16666667
    %v33 = vmul.f32 %v23, %v31
    %v34 = vmul.f32 %v24, %v32
    %35 = vst [vmem:[#allocation5] sm:$0xff] %v33
    %36 = vst [vmem:[#allocation5 + $0x8] sm:$0xff] %v34
    // Predicated region
    $region10: #{tpu_custom_call.1} parent=1 // pred_check
      _
    $region11: #{tpu_custom_call.1} parent=1 // pred_check_branch
      %38 = sbr.rel (0) target = $region13
    $region12: #{tpu_custom_call.1} parent=1 // pred_region
      %40 = vsyncadd [#allocation4], 0
      %s42 = sshll.u32 [#allocation5], 4
      %s43 = int_to_ptr.vmem [resolvable:$true] %s42
      %s44 = sshll.u32 %s1, 4
      %s45 = int_to_ptr.hbm [resolvable:$true] %s44
      %47 = dma.vmem_to_hbm [thread:$0]  %s43, 256, %s45, [#allocation4]
    $region13: #{tpu_custom_call.1} parent=1 // pred_fallthru
      _
    // Predicated region
    $region14: #{tpu_custom_call.1} parent=1 // pred_check
      _
    $region15: #{tpu_custom_call.1} parent=1 // pred_check_branch
      %49 = sbr.rel (0) target = $region17
    $region16: #{tpu_custom_call.1} parent=1 // pred_region
      %51 = dma.done [#allocation4], 256
    $region17: #{tpu_custom_call.1} parent=1 // pred_fallthru
      _
    %52 = vsyncpa [#allocation3], 1
    %53 = vsyncpa [#allocation4], 1

</llo_original>
